<compile_context>
chip_gen: v7x
topology: tpu7x:2x2x1
jax: 0.10.0
libtpu: 0.0.40
codegen_flags: <defaults>
</compile_context>

<pallas_src>
import numpy as np
import jax
import jax.numpy as jnp
from jax.experimental import pallas as pl
from jax.experimental.pallas import tpu as pltpu

_GROUP = 8                              # sublane group size for in-tile reversal
_MAX_TILE_ROWS = 512                    # ~85% of HBM roofline at 512-row tiles
_TILE_BYTE_BUDGET = 4 * 1024 * 1024     # per-buffer cap (4 bufs ~= 16 MiB worst case)
_VMEM_LIMIT_BYTES = 32 * 1024 * 1024    # explicit scoped-VMEM limit (safe on v5e..v7x)


def _sublane_granularity(itemsize):
    """Dtype-aware sublane packing granularity (8 f32 / 16 bf16 / 32 int8-fp8)."""
    if itemsize >= 4:
        return 8
    if itemsize == 2:
        return 16
    return 32


def _flip_axis1_kernel(x_ref, o_ref):
    """x_ref/o_ref: [B, TS, H] VMEM tiles; writes o[:, r, :] = x[:, TS-1-r, :].

    Per 8-sublane output group: 8 mirrored single-row loads, an in-register
    sublane assembly (XLU/VPU, plenty of slack in a copy kernel), and ONE
    full-width 8-sublane store -- never single-sublane masked stores.
    """
    ts = x_ref.shape[1]                       # static at trace time
    for g in range(ts // _GROUP):             # static unroll (<= 64 groups)
        base = _GROUP * g
        rows = [
            x_ref[:, ts - 1 - (base + r): ts - (base + r), :]
            for r in range(_GROUP)
        ]
        o_ref[:, base:base + _GROUP, :] = jnp.concatenate(rows, axis=1)


def _pick_seq_tile(B, S, H, itemsize, gran):
    """Largest multiple of `gran` dividing S, within the VMEM byte budget."""
    row_bytes = max(1, B * H * itemsize)
    max_rows = _TILE_BYTE_BUDGET // row_bytes
    max_rows = min(max_rows, _MAX_TILE_ROWS, S)
    max_rows = max(gran, (max_rows // gran) * gran)
    ts = gran
    cand = gran
    while cand <= max_rows:
        if S % cand == 0:
            ts = cand
        cand += gran
    return ts


def _dim_semantics():
    """parallel everywhere; CORE_PARALLEL on v7x to use both TensorCores."""
    try:
        kind = jax.devices()[0].device_kind.lower()
    except Exception:
        kind = ""
    if "v7" in kind or "tpu7" in kind:
        return (pltpu.CORE_PARALLEL,)
    return ("parallel",)


def _flip_multiple_3d(x):
    """Reverse [B, S, H] along axis 1; requires S % sublane granularity == 0."""
    B, S, H = x.shape
    itemsize = jnp.dtype(x.dtype).itemsize
    gran = _sublane_granularity(itemsize)
    ts = _pick_seq_tile(B, S, H, itemsize, gran)
    n_tiles = S // ts

    return pl.pallas_call(
        _flip_axis1_kernel,
        out_shape=jax.ShapeDtypeStruct((B, S, H), x.dtype),
        grid=(n_tiles,),
        in_specs=[
            # Block-level half of the reversal: output tile i reads the
            # mirrored input tile n_tiles-1-i.
            pl.BlockSpec((B, ts, H), lambda i: (0, n_tiles - 1 - i, 0)),
        ],
        out_specs=pl.BlockSpec((B, ts, H), lambda i: (0, i, 0)),
        compiler_params=pltpu.CompilerParams(
            dimension_semantics=_dim_semantics(),
            vmem_limit_bytes=_VMEM_LIMIT_BYTES,
        ),
        cost_estimate=pl.CostEstimate(
            flops=0,
            transcendentals=0,
            bytes_accessed=2 * B * S * H * itemsize,
        ),
    )(x)


def flip_axis1(x):
    """torch.flip(x, dims=[1]) for a jnp array with ndim >= 2."""
    if x.ndim == 2:
        # [B, S] padding masks: a kernel would need a 1-lane-wide last block
        # dim (1/128 lane efficiency, masked vst) to move a few KB -- XLA's
        # flip is strictly cheaper here (per performance review).
        return jnp.flip(x, axis=1)

    B, S = x.shape[0], x.shape[1]
    rest = x.shape[2:]
    H = int(np.prod(rest))
    flat = x.reshape(B, S, H)

    gran = _sublane_granularity(jnp.dtype(x.dtype).itemsize)
    pad = (-S) % gran
    if pad:
        # Pad at the FRONT: flip(front_pad(x))[:, :S] == flip(x), and the
        # padded seq length is a clean multiple of the sublane granularity.
        flat = jnp.pad(flat, ((0, 0), (pad, 0), (0, 0)))
        out = _flip_multiple_3d(flat)[:, :S, :]
    else:
        out = _flip_multiple_3d(flat)
    return out.reshape((B, S) + rest)


class FlipTensor:
    """JAX/Pallas equivalent of the PyTorch FlipTensor module."""

    def __init__(self, output_shape):
        self.use_image = len(output_shape) != 1

    def __call__(self, tensor, padding_mask=None):
        if self.use_image:
            # Identity pass-through, exactly like the PyTorch module.
            return (tensor, padding_mask)
        reversed_tensor = flip_axis1(tensor)
        if padding_mask is not None:
            reversed_padding_mask = flip_axis1(padding_mask)
            return (reversed_tensor, reversed_padding_mask)
        return (reversed_tensor, None)


if __name__ == "__main__":
    key = jax.random.PRNGKey(0)
    batch, seq, hidden = 2, 16, 128  # hidden kept lane-dense (multiple of 128)

    k1, _ = jax.random.split(key)
    x = jax.random.normal(k1, (batch, seq, hidden), dtype=jnp.float32)
    lengths = jnp.array([seq, seq // 2], dtype=jnp.int32)
    padding_mask = (jnp.arange(seq)[None, :] < lengths[:, None]).astype(jnp.float32)

    flip = FlipTensor(output_shape=(hidden,))  # 1-D output_shape -> flip path
    out, out_mask = flip(x, padding_mask)
    out = jax.block_until_ready(out)
    out_mask = jax.block_until_ready(out_mask)

    ref = jnp.flip(x, axis=1)
    ref_mask = jnp.flip(padding_mask, axis=1)
    assert out.shape == x.shape, out.shape
    assert out_mask.shape == padding_mask.shape, out_mask.shape
    np.testing.assert_array_equal(np.asarray(out), np.asarray(ref))
    np.testing.assert_array_equal(np.asarray(out_mask), np.asarray(ref_mask))

    # No-mask branch.
    out_only, none_mask = flip(x, None)
    jax.block_until_ready(out_only)
    assert none_mask is None
    np.testing.assert_array_equal(np.asarray(out_only), np.asarray(ref))

    # Seq length not a multiple of 8 -> exercises the front-padding tail path.
    x_tail = jax.random.normal(jax.random.PRNGKey(1), (batch, 10, hidden), jnp.float32)
    out_tail, _ = flip(x_tail, None)
    out_tail = jax.block_until_ready(out_tail)
    np.testing.assert_array_equal(np.asarray(out_tail),
                                  np.asarray(jnp.flip(x_tail, axis=1)))

    # use_image=True -> identity pass-through.
    ident = FlipTensor(output_shape=(3, 16, 16))
    same, same_mask = ident(x, padding_mask)
    assert same is x and same_mask is padding_mask

    print("KERNEL_OK")
</pallas_src>

<mosaic_0001>
module attributes {stable_mosaic.version = 11 : i64} {
  func.func @_flip_axis1_kernel(%arg0: i32, %arg1: memref<2x16x128xf32, #tpu.memory_space<vmem>>, %arg2: memref<2x16x128xf32, #tpu.memory_space<vmem>>) attributes {dimension_semantics = [#tpu.dimension_semantics<parallel>], iteration_bounds = array<i64: 1>, scalar_prefetch = 0 : i64, scratch_operands = 0 : i64, tpu.core_type = #tpu.core_type<tc>, window_params = [{transform_indices = @transform_0, window_bounds = array<i64: 2, 16, 128>}, {transform_indices = @transform_1, window_bounds = array<i64: 2, 16, 128>}]} {
    %c0 = arith.constant 0 : index
    %c15 = arith.constant 15 : index
    %c0_0 = arith.constant 0 : index
    %0 = vector.load %arg1[%c0, %c15, %c0_0] : memref<2x16x128xf32, #tpu.memory_space<vmem>>, vector<2x1x128xf32>
    %c0_1 = arith.constant 0 : index
    %c14 = arith.constant 14 : index
    %c0_2 = arith.constant 0 : index
    %1 = vector.load %arg1[%c0_1, %c14, %c0_2] : memref<2x16x128xf32, #tpu.memory_space<vmem>>, vector<2x1x128xf32>
    %c0_3 = arith.constant 0 : index
    %c13 = arith.constant 13 : index
    %c0_4 = arith.constant 0 : index
    %2 = vector.load %arg1[%c0_3, %c13, %c0_4] : memref<2x16x128xf32, #tpu.memory_space<vmem>>, vector<2x1x128xf32>
    %c0_5 = arith.constant 0 : index
    %c12 = arith.constant 12 : index
    %c0_6 = arith.constant 0 : index
    %3 = vector.load %arg1[%c0_5, %c12, %c0_6] : memref<2x16x128xf32, #tpu.memory_space<vmem>>, vector<2x1x128xf32>
    %c0_7 = arith.constant 0 : index
    %c11 = arith.constant 11 : index
    %c0_8 = arith.constant 0 : index
    %4 = vector.load %arg1[%c0_7, %c11, %c0_8] : memref<2x16x128xf32, #tpu.memory_space<vmem>>, vector<2x1x128xf32>
    %c0_9 = arith.constant 0 : index
    %c10 = arith.constant 10 : index
    %c0_10 = arith.constant 0 : index
    %5 = vector.load %arg1[%c0_9, %c10, %c0_10] : memref<2x16x128xf32, #tpu.memory_space<vmem>>, vector<2x1x128xf32>
    %c0_11 = arith.constant 0 : index
    %c9 = arith.constant 9 : index
    %c0_12 = arith.constant 0 : index
    %6 = vector.load %arg1[%c0_11, %c9, %c0_12] : memref<2x16x128xf32, #tpu.memory_space<vmem>>, vector<2x1x128xf32>
    %c0_13 = arith.constant 0 : index
    %c8 = arith.constant 8 : index
    %c0_14 = arith.constant 0 : index
    %7 = vector.load %arg1[%c0_13, %c8, %c0_14] : memref<2x16x128xf32, #tpu.memory_space<vmem>>, vector<2x1x128xf32>
    %8 = tpu.concatenate %0, %1, %2, %3, %4, %5, %6, %7 in 1 : vector<2x1x128xf32>, vector<2x1x128xf32>, vector<2x1x128xf32>, vector<2x1x128xf32>, vector<2x1x128xf32>, vector<2x1x128xf32>, vector<2x1x128xf32>, vector<2x1x128xf32> -> vector<2x8x128xf32>
    %c0_15 = arith.constant 0 : index
    %c0_16 = arith.constant 0 : index
    %c0_17 = arith.constant 0 : index
    %9 = vector.load %arg2[%c0_15, %c0_16, %c0_17] : memref<2x16x128xf32, #tpu.memory_space<vmem>>, vector<2x8x128xf32>
    tpu.vector_store %arg2[%c0_15, %c0_16, %c0_17], %8 {strides = array<i32>} : memref<2x16x128xf32, #tpu.memory_space<vmem>>, vector<2x8x128xf32>,
    %c0_18 = arith.constant 0 : index
    %c7 = arith.constant 7 : index
    %c0_19 = arith.constant 0 : index
    %10 = vector.load %arg1[%c0_18, %c7, %c0_19] : memref<2x16x128xf32, #tpu.memory_space<vmem>>, vector<2x1x128xf32>
    %c0_20 = arith.constant 0 : index
    %c6 = arith.constant 6 : index
    %c0_21 = arith.constant 0 : index
    %11 = vector.load %arg1[%c0_20, %c6, %c0_21] : memref<2x16x128xf32, #tpu.memory_space<vmem>>, vector<2x1x128xf32>
    %c0_22 = arith.constant 0 : index
    %c5 = arith.constant 5 : index
    %c0_23 = arith.constant 0 : index
    %12 = vector.load %arg1[%c0_22, %c5, %c0_23] : memref<2x16x128xf32, #tpu.memory_space<vmem>>, vector<2x1x128xf32>
    %c0_24 = arith.constant 0 : index
    %c4 = arith.constant 4 : index
    %c0_25 = arith.constant 0 : index
    %13 = vector.load %arg1[%c0_24, %c4, %c0_25] : memref<2x16x128xf32, #tpu.memory_space<vmem>>, vector<2x1x128xf32>
    %c0_26 = arith.constant 0 : index
    %c3 = arith.constant 3 : index
    %c0_27 = arith.constant 0 : index
    %14 = vector.load %arg1[%c0_26, %c3, %c0_27] : memref<2x16x128xf32, #tpu.memory_space<vmem>>, vector<2x1x128xf32>
    %c0_28 = arith.constant 0 : index
    %c2 = arith.constant 2 : index
    %c0_29 = arith.constant 0 : index
    %15 = vector.load %arg1[%c0_28, %c2, %c0_29] : memref<2x16x128xf32, #tpu.memory_space<vmem>>, vector<2x1x128xf32>
    %c0_30 = arith.constant 0 : index
    %c1 = arith.constant 1 : index
    %c0_31 = arith.constant 0 : index
    %16 = vector.load %arg1[%c0_30, %c1, %c0_31] : memref<2x16x128xf32, #tpu.memory_space<vmem>>, vector<2x1x128xf32>
    %c0_32 = arith.constant 0 : index
    %c0_33 = arith.constant 0 : index
    %c0_34 = arith.constant 0 : index
    %17 = vector.load %arg1[%c0_32, %c0_33, %c0_34] : memref<2x16x128xf32, #tpu.memory_space<vmem>>, vector<2x1x128xf32>
    %18 = tpu.concatenate %10, %11, %12, %13, %14, %15, %16, %17 in 1 : vector<2x1x128xf32>, vector<2x1x128xf32>, vector<2x1x128xf32>, vector<2x1x128xf32>, vector<2x1x128xf32>, vector<2x1x128xf32>, vector<2x1x128xf32>, vector<2x1x128xf32> -> vector<2x8x128xf32>
    %c0_35 = arith.constant 0 : index
    %c8_36 = arith.constant 8 : index
    %c0_37 = arith.constant 0 : index
    %19 = vector.load %arg2[%c0_35, %c8_36, %c0_37] : memref<2x16x128xf32, #tpu.memory_space<vmem>>, vector<2x8x128xf32>
    tpu.vector_store %arg2[%c0_35, %c8_36, %c0_37], %18 {strides = array<i32>} : memref<2x16x128xf32, #tpu.memory_space<vmem>>, vector<2x8x128xf32>,
    return
  }
  func.func @transform_0(%arg0: i32) -> (i32, i32, i32) {
    %c0_i32 = arith.constant 0 : i32
    %0 = arith.subi %c0_i32, %arg0 : i32
    %c0_i32_0 = arith.constant 0 : i32
    %c0_i32_1 = arith.constant 0 : i32
    %c0_i32_2 = arith.constant 0 : i32
    return %c0_i32_0, %0, %c0_i32_1 : i32, i32, i32
  }
  func.func @transform_1(%arg0: i32) -> (i32, i32, i32) {
    %c0_i32 = arith.constant 0 : i32
    %c0_i32_0 = arith.constant 0 : i32
    %c0_i32_1 = arith.constant 0 : i32
    return %c0_i32, %arg0, %c0_i32_0 : i32, i32, i32
  }
}

</mosaic_0001>

<llo_original>
// kernel: tpu_custom_call.1
$region0: #{tpu_custom_call.1}
  #allocation0 [shape = 'u32[]', space=smem, size = 0x4, offset = 0x4, fixed_abs, tag = 'smem constant byte address 0x4 - core index']
  #allocation1 [shape = 'u32[144,128]{1,0:T(1,128)}', space=vmem, size = 0x12000, scoped, tag = 'internal scratch']
  %s0 = inlined_call_operand.hbm [shape: f32[2,16,128], index: 0, kind: input, shape index: {}]
  %s1 = inlined_call_operand.hbm [shape: f32[2,16,128], index: 1, kind: output, shape index: {}]
  %s2 = sld [smem:[#allocation0]]
  $region18: #{tpu_custom_call.1} parent=0
    _
  %s4 = ssub.s32 1, %s2
  %s5 = scalar_select 0, %s4, %s2
  $region1: #{tpu_custom_call.1} parent=0
    #allocation2 [shape = 'u8[16384]{0}', space=vmem, size = 0x4000, scoped, tag = 'input window, operand 0, single buffered']
    #allocation3 [shape = 's32[1]{0}', space=sflag, size = 0x4, scoped, tag = 'scoped memory for tpu_custom_call.1']
    #allocation4 [shape = 's32[1]{0}', space=sflag, size = 0x4, scoped, tag = 'scoped memory for tpu_custom_call.1']
    #allocation5 [shape = 'u8[16384]{0}', space=vmem, size = 0x4000, scoped, tag = 'output window, operand 0, single buffered']
    %6 = vsyncpa [#allocation3], 0
    %7 = vsyncpa [#allocation4], 0
    // Predicated region
    $region2: #{tpu_custom_call.1} parent=1 // pred_check
      _
    $region3: #{tpu_custom_call.1} parent=1 // pred_check_branch
      %9 = sbr.rel (0) target = $region5
    $region4: #{tpu_custom_call.1} parent=1 // pred_region
      %s10 = ssub.s32 0, 0
      %s11 = smul.u32 2, %s10
      %s13 = ssub.s32 512, 512
      %14 = vsyncadd [#allocation3], %s13
      %s15 = smul.addr %s11, 128
      %s16 = scalar_lea.hbm %s0, %s15
      %s17 = sshll.u32 [#allocation2], 4
      %s18 = int_to_ptr.vmem [resolvable:$true] %s17
      %23 = dma.hbm_to_vmem [thread:$0]  %s16, 512, %s18, [#allocation3], 128, 128, 8
    $region5: #{tpu_custom_call.1} parent=1 // pred_fallthru
      _
    // Predicated region
    $region6: #{tpu_custom_call.1} parent=1 // pred_check
      _
    $region7: #{tpu_custom_call.1} parent=1 // pred_check_branch
      %25 = sbr.rel (0) target = $region9
    $region8: #{tpu_custom_call.1} parent=1 // pred_region
      %26 = dma.done [#allocation3], 512
    $region9: #{tpu_custom_call.1} parent=1 // pred_fallthru
      _
    %s27 = ssub.s32 0, 0
    %s28 = smul.u32 2, %s27
    %v29 = vld [vmem:[#allocation2 + $0xf] sm:$0x1]
    %v30 = vld [vmem:[#allocation2 + $0x1f] sm:$0x1]
    %v31 = vld [vmem:[#allocation2 + $0xe] sm:$0x1]
    %v32 = vld [vmem:[#allocation2 + $0x1e] sm:$0x1]
    %v33 = vld [vmem:[#allocation2 + $0xd] sm:$0x1]
    %v34 = vld [vmem:[#allocation2 + $0x1d] sm:$0x1]
    %v35 = vld [vmem:[#allocation2 + $0xc] sm:$0x1]
    %v36 = vld [vmem:[#allocation2 + $0x1c] sm:$0x1]
    %v37 = vld [vmem:[#allocation2 + $0xb] sm:$0x1]
    %v38 = vld [vmem:[#allocation2 + $0x1b] sm:$0x1]
    %v39 = vld [vmem:[#allocation2 + $0xa] sm:$0x1]
    %v40 = vld [vmem:[#allocation2 + $0x1a] sm:$0x1]
    %v41 = vld [vmem:[#allocation2 + $0x9] sm:$0x1]
    %v42 = vld [vmem:[#allocation2 + $0x19] sm:$0x1]
    %v43 = vld [vmem:[#allocation2 + $0x8] sm:$0x1]
    %v44 = vld [vmem:[#allocation2 + $0x18] sm:$0x1]
    %v47 = vrot.slane %v31, 7
    %v48 = vrot.slane %v32, 7
    %v53 = vrot.slane %v33, 6
    %v54 = vrot.slane %v34, 6
    %v59 = vrot.slane %v35, 5
    %v60 = vrot.slane %v36, 5
    %v65 = vrot.slane %v37, 4
    %v66 = vrot.slane %v38, 4
    %v71 = vrot.slane %v39, 3
    %v72 = vrot.slane %v40, 3
    %v77 = vrot.slane %v41, 2
    %v78 = vrot.slane %v42, 2
    %v83 = vrot.slane %v43, 1
    %v84 = vrot.slane %v44, 1
    %vm87 = vcmask 1040384
    %v88 = vsel %vm87, %v29, %v47
    %v89 = vsel %vm87, %v30, %v48
    %vm90 = vcmask 1041408
    %v91 = vsel %vm90, %v88, %v53
    %v92 = vsel %vm90, %v89, %v54
    %vm93 = vcmask 1042432
    %v94 = vsel %vm93, %v91, %v59
    %v95 = vsel %vm93, %v92, %v60
    %vm96 = vcmask 1043456
    %v97 = vsel %vm96, %v94, %v65
    %v98 = vsel %vm96, %v95, %v66
    %vm99 = vcmask 1044480
    %v100 = vsel %vm99, %v97, %v71
    %v101 = vsel %vm99, %v98, %v72
    %vm102 = vcmask 1045504
    %v103 = vsel %vm102, %v100, %v77
    %v104 = vsel %vm102, %v101, %v78
    %vm105 = vcmask 1046528
    %v106 = vsel %vm105, %v103, %v83
    %v107 = vsel %vm105, %v104, %v84
    %108 = vst [vmem:[#allocation5] sm:$0xff] %v106
    %109 = vst [vmem:[#allocation5 + $0x10] sm:$0xff] %v107
    %v110 = vld [vmem:[#allocation2 + $0x7] sm:$0x1]
    %v111 = vld [vmem:[#allocation2 + $0x17] sm:$0x1]
    %v112 = vld [vmem:[#allocation2 + $0x6] sm:$0x1]
    %v113 = vld [vmem:[#allocation2 + $0x16] sm:$0x1]
    %v114 = vld [vmem:[#allocation2 + $0x5] sm:$0x1]
    %v115 = vld [vmem:[#allocation2 + $0x15] sm:$0x1]
    %v116 = vld [vmem:[#allocation2 + $0x4] sm:$0x1]
    %v117 = vld [vmem:[#allocation2 + $0x14] sm:$0x1]
    %v118 = vld [vmem:[#allocation2 + $0x3] sm:$0x1]
    %v119 = vld [vmem:[#allocation2 + $0x13] sm:$0x1]
    %v120 = vld [vmem:[#allocation2 + $0x2] sm:$0x1]
    %v121 = vld [vmem:[#allocation2 + $0x12] sm:$0x1]
    %v122 = vld [vmem:[#allocation2 + $0x1] sm:$0x1]
    %v123 = vld [vmem:[#allocation2 + $0x11] sm:$0x1]
    %v124 = vld [vmem:[#allocation2] sm:$0x1]
    %v125 = vld [vmem:[#allocation2 + $0x10] sm:$0x1]
    %v128 = vrot.slane %v112, 7
    %v129 = vrot.slane %v113, 7
    %v134 = vrot.slane %v114, 6
    %v135 = vrot.slane %v115, 6
    %v140 = vrot.slane %v116, 5
    %v141 = vrot.slane %v117, 5
    %v146 = vrot.slane %v118, 4
    %v147 = vrot.slane %v119, 4
    %v152 = vrot.slane %v120, 3
    %v153 = vrot.slane %v121, 3
    %v158 = vrot.slane %v122, 2
    %v159 = vrot.slane %v123, 2
    %v164 = vrot.slane %v124, 1
    %v165 = vrot.slane %v125, 1
    %v168 = vsel %vm87, %v110, %v128
    %v169 = vsel %vm87, %v111, %v129
    %v170 = vsel %vm90, %v168, %v134
    %v171 = vsel %vm90, %v169, %v135
    %v172 = vsel %vm93, %v170, %v140
    %v173 = vsel %vm93, %v171, %v141
    %v174 = vsel %vm96, %v172, %v146
    %v175 = vsel %vm96, %v173, %v147
    %v176 = vsel %vm99, %v174, %v152
    %v177 = vsel %vm99, %v175, %v153
    %v178 = vsel %vm102, %v176, %v158
    %v179 = vsel %vm102, %v177, %v159
    %v180 = vsel %vm105, %v178, %v164
    %v181 = vsel %vm105, %v179, %v165
    %182 = vst [vmem:[#allocation5 + $0x8] sm:$0xff] %v180
    %183 = vst [vmem:[#allocation5 + $0x18] sm:$0xff] %v181
    // Predicated region
    $region10: #{tpu_custom_call.1} parent=1 // pred_check
      _
    $region11: #{tpu_custom_call.1} parent=1 // pred_check_branch
      %185 = sbr.rel (0) target = $region13
    $region12: #{tpu_custom_call.1} parent=1 // pred_region
      %s187 = ssub.s32 512, 512
      %188 = vsyncadd [#allocation4], %s187
      %s189 = sshll.u32 [#allocation5], 4
      %s190 = int_to_ptr.vmem [resolvable:$true] %s189
      %195 = dma.vmem_to_hbm [thread:$0]  %s190, 512, %s1, [#allocation4], 128, 128, 8
    $region13: #{tpu_custom_call.1} parent=1 // pred_fallthru
      _
    // Predicated region
    $region14: #{tpu_custom_call.1} parent=1 // pred_check
      _
    $region15: #{tpu_custom_call.1} parent=1 // pred_check_branch
      %197 = sbr.rel (0) target = $region17
    $region16: #{tpu_custom_call.1} parent=1 // pred_region
      %198 = dma.done [#allocation4], 512
    $region17: #{tpu_custom_call.1} parent=1 // pred_fallthru
      _
    %199 = vsyncpa [#allocation3], 1
    %200 = vsyncpa [#allocation4], 1

</llo_original>
